<compile_context>
chip_gen: v6e
topology: v6e:2x2x1
jax: 0.10.0
libtpu: 0.0.40
codegen_flags: <defaults>
</compile_context>

<pallas_src>
import jax
import jax.numpy as jnp
from jax.experimental import pallas as pl
from jax.experimental.pallas import tpu as pltpu


def _round_up(n, m):
    return ((n + m - 1) // m) * m


# ------------------------------ fused kernel ---------------------------------
def _siamese_kernel(x_ref, bw_ref, bb_ref, ew_ref, eb_ref, feat_ref, logit_ref):
    # x_ref   : (2B, C, HW) f32   bw_ref: (C, Dp)  bf16   bb_ref: (1, Dp) f32
    # ew_ref  : (Dp, Kp)    bf16  eb_ref: (1, Kp)  f32
    # feat_ref: (2B, Dp)    f32   logit_ref: (B, Kp) f32        (Dp = Kp = 128)
    two_b = feat_ref.shape[0]
    b = two_b // 2

    # --- shared base model: GAP -> linear -> ReLU (one MXU matmul for both views)
    pooled = jnp.mean(x_ref[...], axis=-1)                       # (2B, C)  f32
    feat = jnp.dot(pooled.astype(jnp.bfloat16), bw_ref[...],
                   preferred_element_type=jnp.float32)           # (2B, Dp) bf16 MXU
    feat = jnp.maximum(feat + bb_ref[...], 0.0)                  # bias + ReLU, f32 VPU
    feat_ref[...] = feat.astype(feat_ref.dtype)                  # lane-dense store

    # --- embed model (EltwiseSubEmbed): (f1 - f2)^2 -> linear, f1/f2 stay in VMEM
    diff = feat[:b, :] - feat[b:, :]                             # (B, Dp)  f32
    d2 = diff * diff
    logits = jnp.dot(d2.astype(jnp.bfloat16), ew_ref[...],
                     preferred_element_type=jnp.float32)         # (B, Kp)  bf16 MXU
    logit_ref[...] = (logits + eb_ref[...]).astype(logit_ref.dtype)


# ------------------------------ SiameseNet forward ---------------------------
def siamese_net(x1, x2, params):
    """Forward pass matching SiameseNet.forward with embed_model != None."""
    B, C, H, W = x1.shape
    HW = H * W
    D = params["base_w"].shape[1]
    K = params["embed_w"].shape[1]
    Dp = _round_up(D, 128)
    Kp = _round_up(K, 128)

    # Stack both views so one matmul reuses base_w; flatten spatial dims.
    x = jnp.concatenate([x1, x2], axis=0).reshape(2 * B, C, HW).astype(jnp.float32)

    # Zero-pad parameters to lane-dense (multiple-of-128) widths; weights in bf16.
    bw = jnp.zeros((C, Dp), jnp.bfloat16).at[:, :D].set(
        params["base_w"].astype(jnp.bfloat16))
    bb = jnp.zeros((1, Dp), jnp.float32).at[:, :D].set(
        params["base_b"].astype(jnp.float32))
    ew = jnp.zeros((Dp, Kp), jnp.bfloat16).at[:D, :K].set(
        params["embed_w"].astype(jnp.bfloat16))
    eb = jnp.zeros((1, Kp), jnp.float32).at[:, :K].set(
        params["embed_b"].astype(jnp.float32))

    flops = (2 * B) * C * HW                     # GAP adds
    flops += 2 * (2 * B) * C * Dp                # base matmul
    flops += 2 * B * Dp * Kp                     # embed matmul
    bytes_accessed = (x.size * 4 + bw.size * 2 + bb.size * 4
                      + ew.size * 2 + eb.size * 4
                      + (2 * B) * Dp * 4 + B * Kp * 4)

    vmem_spec = pl.BlockSpec(memory_space=pltpu.MemorySpace.VMEM)
    feats, logits_p = pl.pallas_call(
        _siamese_kernel,
        out_shape=(jax.ShapeDtypeStruct((2 * B, Dp), jnp.float32),
                   jax.ShapeDtypeStruct((B, Kp), jnp.float32)),
        in_specs=[vmem_spec] * 5,
        out_specs=(vmem_spec, vmem_spec),
        cost_estimate=pl.CostEstimate(flops=int(flops), transcendentals=0,
                                      bytes_accessed=int(bytes_accessed)),
    )(x, bw, bb, ew, eb)

    f1 = feats[:B, :D]
    f2 = feats[B:, :D]
    logits = logits_p[:, :K]
    return f1, f2, logits


def make_params(key, C, D, K):
    k1, k2, k3, k4 = jax.random.split(key, 4)
    return {
        "base_w": jax.random.normal(k1, (C, D), jnp.float32) * 0.1,
        "base_b": jax.random.normal(k2, (D,), jnp.float32) * 0.01,
        "embed_w": jax.random.normal(k3, (D, K), jnp.float32) * 0.1,
        "embed_b": jax.random.normal(k4, (K,), jnp.float32) * 0.01,
    }


if __name__ == "__main__":
    B, C, H, W = 2, 4, 16, 16
    D, K = 32, 8

    key = jax.random.PRNGKey(0)
    kx1, kx2, kp = jax.random.split(key, 3)
    x1 = jax.random.normal(kx1, (B, C, H, W), jnp.float32)
    x2 = jax.random.normal(kx2, (B, C, H, W), jnp.float32)
    params = make_params(kp, C, D, K)

    siamese_jit = jax.jit(siamese_net)
    f1, f2, logits = siamese_jit(x1, x2, params)
    jax.block_until_ready((f1, f2, logits))

    # ---- sanity check vs pure-JAX reference (mimics bf16-operand / f32-acc MXU)
    bw_ref = params["base_w"].astype(jnp.bfloat16).astype(jnp.float32)
    ew_ref = params["embed_w"].astype(jnp.bfloat16).astype(jnp.float32)

    def ref_base(x):
        pooled = jnp.mean(x.reshape(B, C, H * W), axis=-1)
        pooled = pooled.astype(jnp.bfloat16).astype(jnp.float32)
        return jnp.maximum(pooled @ bw_ref + params["base_b"], 0.0)

    rf1, rf2 = ref_base(x1), ref_base(x2)
    rd2 = ((rf1 - rf2) ** 2).astype(jnp.bfloat16).astype(jnp.float32)
    rlogits = rd2 @ ew_ref + params["embed_b"]

    assert jnp.allclose(f1, rf1, atol=5e-3, rtol=5e-3), "base feature mismatch"
    assert jnp.allclose(f2, rf2, atol=5e-3, rtol=5e-3), "base feature mismatch"
    assert jnp.allclose(logits, rlogits, atol=5e-3, rtol=5e-3), "embed logits mismatch"

    print("KERNEL_OK")
</pallas_src>

<mosaic_0001>
module attributes {stable_mosaic.version = 11 : i64} {
  func.func @_siamese_kernel(%arg0: memref<4x4x256xf32, #tpu.memory_space<vmem>>, %arg1: memref<4x128xbf16, #tpu.memory_space<vmem>>, %arg2: memref<1x128xf32, #tpu.memory_space<vmem>>, %arg3: memref<128x128xbf16, #tpu.memory_space<vmem>>, %arg4: memref<1x128xf32, #tpu.memory_space<vmem>>, %arg5: memref<4x128xf32, #tpu.memory_space<vmem>>, %arg6: memref<2x128xf32, #tpu.memory_space<vmem>>) attributes {dimension_semantics = [], scalar_prefetch = 0 : i64, scratch_operands = 0 : i64, tpu.core_type = #tpu.core_type<tc>} {
    %c0 = arith.constant 0 : index
    %c0_0 = arith.constant 0 : index
    %c0_1 = arith.constant 0 : index
    %0 = vector.load %arg0[%c0, %c0_0, %c0_1] : memref<4x4x256xf32, #tpu.memory_space<vmem>>, vector<4x4x256xf32>
    %cst = arith.constant dense<0.000000e+00> : vector<4x4xf32>
    %1 = vector.multi_reduction <add>, %0, %cst [2] : vector<4x4x256xf32> to vector<4x4xf32>
    %cst_2 = arith.constant 2.560000e+02 : f32
    %2 = vector.broadcast %cst_2 : f32 to vector<4x4xf32>
    %3 = arith.divf %1, %2 : vector<4x4xf32>
    %4 = arith.truncf %3 : vector<4x4xf32> to vector<4x4xbf16>
    %c0_3 = arith.constant 0 : index
    %c0_4 = arith.constant 0 : index
    %5 = vector.load %arg1[%c0_3, %c0_4] : memref<4x128xbf16, #tpu.memory_space<vmem>>, vector<4x128xbf16>
    %cst_5 = arith.constant dense<0.000000e+00> : vector<4x128xf32>
    %6 = tpu.matmul %4, %5, %cst_5 {dimension_numbers = #tpu.dot_dimension_numbers<[1], [0], [0], [1], [0, 0, 1, 1], [], []>} : vector<4x4xbf16>, vector<4x128xbf16>, vector<4x128xf32> -> vector<4x128xf32>
    %c0_6 = arith.constant 0 : index
    %c0_7 = arith.constant 0 : index
    %7 = vector.load %arg2[%c0_6, %c0_7] : memref<1x128xf32, #tpu.memory_space<vmem>>, vector<1x128xf32>
    %8 = vector.broadcast %7 : vector<1x128xf32> to vector<4x128xf32>
    %9 = arith.addf %6, %8 : vector<4x128xf32>
    %cst_8 = arith.constant 0.000000e+00 : f32
    %10 = vector.broadcast %cst_8 : f32 to vector<4x128xf32>
    %11 = arith.maximumf %9, %10 : vector<4x128xf32>
    %c0_9 = arith.constant 0 : index
    %c0_10 = arith.constant 0 : index
    %12 = vector.load %arg5[%c0_9, %c0_10] : memref<4x128xf32, #tpu.memory_space<vmem>>, vector<4x128xf32>
    tpu.vector_store %arg5[%c0_9, %c0_10], %11 {strides = array<i32>} : memref<4x128xf32, #tpu.memory_space<vmem>>, vector<4x128xf32>,
    %13 = vector.extract_strided_slice %11 {offsets = [0, 0], sizes = [2, 128], strides = [1, 1]} : vector<4x128xf32> to vector<2x128xf32>
    %14 = vector.extract_strided_slice %11 {offsets = [2, 0], sizes = [2, 128], strides = [1, 1]} : vector<4x128xf32> to vector<2x128xf32>
    %15 = arith.subf %13, %14 : vector<2x128xf32>
    %16 = arith.mulf %15, %15 : vector<2x128xf32>
    %17 = arith.truncf %16 : vector<2x128xf32> to vector<2x128xbf16>
    %c0_11 = arith.constant 0 : index
    %c0_12 = arith.constant 0 : index
    %18 = vector.load %arg3[%c0_11, %c0_12] : memref<128x128xbf16, #tpu.memory_space<vmem>>, vector<128x128xbf16>
    %cst_13 = arith.constant dense<0.000000e+00> : vector<2x128xf32>
    %19 = tpu.matmul %17, %18, %cst_13 {dimension_numbers = #tpu.dot_dimension_numbers<[1], [0], [0], [1], [0, 0, 1, 1], [], []>} : vector<2x128xbf16>, vector<128x128xbf16>, vector<2x128xf32> -> vector<2x128xf32>
    %c0_14 = arith.constant 0 : index
    %c0_15 = arith.constant 0 : index
    %20 = vector.load %arg4[%c0_14, %c0_15] : memref<1x128xf32, #tpu.memory_space<vmem>>, vector<1x128xf32>
    %21 = vector.broadcast %20 : vector<1x128xf32> to vector<2x128xf32>
    %22 = arith.addf %19, %21 : vector<2x128xf32>
    %c0_16 = arith.constant 0 : index
    %c0_17 = arith.constant 0 : index
    %23 = vector.load %arg6[%c0_16, %c0_17] : memref<2x128xf32, #tpu.memory_space<vmem>>, vector<2x128xf32>
    tpu.vector_store %arg6[%c0_16, %c0_17], %22 {strides = array<i32>} : memref<2x128xf32, #tpu.memory_space<vmem>>, vector<2x128xf32>,
    return
  }
}

</mosaic_0001>

<llo_original>
// kernel: siamese_net.1
$region0: #{siamese_net.1}
  #allocation0 [shape = 'u32[]', space=smem, size = 0x4, offset = 0x4, fixed_abs, tag = 'smem constant byte address 0x4 - core index']
  #allocation1 [shape = 'u32[144,128]{1,0:T(1,128)}', space=vmem, size = 0x12000, scoped, tag = 'internal scratch']
  %s0 = inlined_call_operand.vmem [shape: f32[4,4,256], index: 0, kind: input, shape index: {}]
  %s1 = inlined_call_operand.vmem [shape: bf16[4,128], index: 1, kind: input, shape index: {}]
  %s2 = inlined_call_operand.vmem [shape: f32[1,128], index: 2, kind: input, shape index: {}]
  %s3 = inlined_call_operand.vmem [shape: bf16[128,128], index: 3, kind: input, shape index: {}]
  %s4 = inlined_call_operand.vmem [shape: f32[1,128], index: 4, kind: input, shape index: {}]
  %s5 = inlined_call_operand.vmem [shape: f32[4,128], index: 5, kind: output, shape index: {0}]
  %s6 = inlined_call_operand.hbm [shape: f32[2,128], index: 6, kind: output, shape index: {1}]
  %7 = xla_tuple %s5, %s6
  %s8 = sld [smem:[#allocation0]]
  $region38: #{siamese_net.1} parent=0
    _
  %s10 = ssub.s32 1, %s8
  %s11 = scalar_select 0, %s10, %s8
  $region1: #{siamese_net.1} parent=0
    #allocation2 [shape = 'u8[1024]{0}', space=vmem, size = 0x400, scoped, tag = 'output window, operand 1, single buffered']
    #allocation3 [shape = 's32[1]{0}', space=sflag, size = 0x4, scoped, tag = 'scoped memory for siamese_net.1']
    %12 = vsyncpa [#allocation3], 0
    // Predicated region
    $region2: #{siamese_net.1} parent=1 // pred_check
      _
    $region3: #{siamese_net.1} parent=1 // pred_check_branch
      %14 = sbr.rel (0) target = $region5
    $region4: #{siamese_net.1} parent=1 // pred_region
      _
    $region5: #{siamese_net.1} parent=1 // pred_fallthru
      _
    // Predicated region
    $region6: #{siamese_net.1} parent=1 // pred_check
      _
    $region7: #{siamese_net.1} parent=1 // pred_check_branch
      %16 = sbr.rel (0) target = $region9
    $region8: #{siamese_net.1} parent=1 // pred_region
      _
    $region9: #{siamese_net.1} parent=1 // pred_fallthru
      _
    // Predicated region
    $region10: #{siamese_net.1} parent=1 // pred_check
      _
    $region11: #{siamese_net.1} parent=1 // pred_check_branch
      %18 = sbr.rel (0) target = $region13
    $region12: #{siamese_net.1} parent=1 // pred_region
      _
    $region13: #{siamese_net.1} parent=1 // pred_fallthru
      _
    // Predicated region
    $region14: #{siamese_net.1} parent=1 // pred_check
      _
    $region15: #{siamese_net.1} parent=1 // pred_check_branch
      %20 = sbr.rel (0) target = $region17
    $region16: #{siamese_net.1} parent=1 // pred_region
      _
    $region17: #{siamese_net.1} parent=1 // pred_fallthru
      _
    // Predicated region
    $region18: #{siamese_net.1} parent=1 // pred_check
      _
    $region19: #{siamese_net.1} parent=1 // pred_check_branch
      %22 = sbr.rel (0) target = $region21
    $region20: #{siamese_net.1} parent=1 // pred_region
      _
    $region21: #{siamese_net.1} parent=1 // pred_fallthru
      _
    %v24 = vld [vmem:[%s0] sm:$0xff]
    %v25 = vld [vmem:[%s0 + $0x8] sm:$0xff]
    %v26 = vld [vmem:[%s0 + $0x10] sm:$0xff]
    %v27 = vld [vmem:[%s0 + $0x18] sm:$0xff]
    %v32 = vcombine.high %v24, %v24
    %v33 = vcombine.high %v25, %v25
    %v34 = vcombine.high %v26, %v26
    %v35 = vcombine.high %v27, %v27
    %vm40 = vcmask 1043456
    %v41 = vsel %vm40, %v24, 0.0
    %v42 = vsel %vm40, %v32, 0.0
    %v43 = vadd.f32 %v41, %v42
    %44 = vadd.xlane.f32.xlu0 %v43
    %v45 = vpop.xlane.xlu0 %44
    %v46 = vsel %vm40, %v25, 0.0
    %v47 = vsel %vm40, %v33, 0.0
    %v48 = vadd.f32 %v46, %v47
    %49 = vadd.xlane.f32.xlu0 %v48
    %v50 = vpop.xlane.xlu0 %49
    %v51 = vsel %vm40, %v26, 0.0
    %v52 = vsel %vm40, %v34, 0.0
    %v53 = vadd.f32 %v51, %v52
    %54 = vadd.xlane.f32.xlu0 %v53
    %v55 = vpop.xlane.xlu0 %54
    %v56 = vsel %vm40, %v27, 0.0
    %v57 = vsel %vm40, %v35, 0.0
    %v58 = vadd.f32 %v56, %v57
    %59 = vadd.xlane.f32.xlu0 %v58
    %v60 = vpop.xlane.xlu0 %59
    %v61 = vrcp.pop 256.0
    %v62 = vmul.f32 %v45, %v61
    %v63 = vmul.f32 %v50, %v61
    %v64 = vmul.f32 %v55, %v61
    %v65 = vmul.f32 %v60, %v61
    %v66 = vpack.c.bf16 %v62, %v62
    %v67 = vpack.c.bf16 %v63, %v63
    %v68 = vpack.c.bf16 %v64, %v64
    %v69 = vpack.c.bf16 %v65, %v65
    %v70 = vld [vmem:[%s1] sm:$0x3]
    %v71 = vld [vmem:[%s2] sm:$0x1]
    %v73 = vlaneseq
    %v74 = vshrl.u32 %v73, 7
    %v75 = vsub.s32 0, %v74
    %v76 = vrot.slane %v71, %v75
    %v82 = vunpack.c.l.b16 %v66
    %v83 = vunpack.c.l.b16 %v67
    %v84 = vunpack.c.l.b16 %v68
    %v85 = vunpack.c.l.b16 %v69
    %v86 = vlaneseq
    %v87 = vand.u32 %v86, 127
    %v88 = vlaneseq
    %v89 = vshrl.u32 %v88, 7
    %v90 = vsub.s32 %v87, %v89
    %v91 = vrot.slane %v82, %v90
    %v92 = vlaneseq
    %v93 = vshrl.u32 %v92, 7
    %v94 = vsub.s32 %v87, %v93
    %v95 = vrot.slane %v83, %v94
    %v96 = vlaneseq
    %v97 = vshrl.u32 %v96, 7
    %v98 = vsub.s32 %v87, %v97
    %v99 = vrot.slane %v84, %v98
    %v100 = vlaneseq
    %v101 = vshrl.u32 %v100, 7
    %v102 = vsub.s32 %v87, %v101
    %v103 = vrot.slane %v85, %v102
    %vm104 = vcmask 1041409
    %v105 = vsel %vm104, %v95, %v91
    %vm106 = vcmask 1042434
    %v107 = vsel %vm106, %v99, %v105
    %vm108 = vcmask 1043459
    %v109 = vsel %vm108, %v103, %v107
    %v110 = vpack.c.b16 %v109, %v109
    %vm111 = vcmask 31744
    %v113 = vsel %vm111, %v110, 0
    %vm115 = vcmask 1041408
    %v117 = vsel %vm115, %v70, 0
    %119 = vmatprep.subr.bf16.mxu0 0
    %120 = vmatpush1.bf16.msra.mxu0 0
    %121 = vmatprep.subr.bf16.mxu0 0
    %122 = vmatpush1.bf16.msra.mxu0 0
    %123 = vmatprep.subr.bf16.mxu0 0
    %124 = vmatpush1.bf16.msra.mxu0 0
    %125 = vmatprep.subr.bf16.mxu0 0
    %126 = vmatpush1.bf16.msra.mxu0 0
    %127 = vmatprep.subr.bf16.mxu0 0
    %128 = vmatpush1.bf16.msra.mxu0 0
    %129 = vmatprep.subr.bf16.mxu0 0
    %130 = vmatpush1.bf16.msra.mxu0 0
    %131 = vmatprep.subr.bf16.mxu0 0
    %132 = vmatpush1.bf16.msra.mxu0 0
    %133 = vmatprep.subr.bf16.mxu0 0
    %134 = vmatpush1.bf16.msra.mxu0 %v117
    %135 = vmatprep.subr.bf16.mxu0 0
    %136 = vmatpush2.bf16.msra.mxu0 0
    %137 = vmatprep.subr.bf16.mxu0 0
    %138 = vmatpush2.bf16.msra.mxu0 0
    %139 = vmatprep.subr.bf16.mxu0 0
    %140 = vmatpush2.bf16.msra.mxu0 0
    %141 = vmatprep.subr.bf16.mxu0 0
    %142 = vmatpush2.bf16.msra.mxu0 0
    %143 = vmatprep.subr.bf16.mxu0 0
    %144 = vmatpush2.bf16.msra.mxu0 0
    %145 = vmatprep.subr.bf16.mxu0 0
    %146 = vmatpush2.bf16.msra.mxu0 0
    %147 = vmatprep.subr.bf16.mxu0 0
    %148 = vmatpush2.bf16.msra.mxu0 0
    %149 = vmatprep.subr.bf16.mxu0 0
    %150 = vmatpush2.bf16.msra.mxu0 0
    %151 = vmatprep.mubr.bf16.mxu0 0
    %152 = vmatmul.mubr.bf16.gmra.mxu0 %v113
    %v153 = vpop.f32.mrf.mxu0
    %v154 = vadd.f32 %v76, %v153
    %v155 = vpop.f32.mrf.mxu0
    %v156 = vpop.f32.mrf.mxu0
    %v157 = vpop.f32.mrf.mxu0
    %158 = vdwg.mxu0
    %v159 = vmax.f32 %v154, 0.0
    %160 = vst [vmem:[%s5] sm:$0xf] %v159
    %v162 = vrot.slane %v159, 2
    %v164 = vsub.f32 %v159, %v162
    %v165 = vmul.f32 %v164, %v164
    %v166 = vpack.c.bf16 %v165, %v165
    %v167 = vld [vmem:[%s3] sm:$0xf]
    %v168 = vld [vmem:[%s3 + $0x4] sm:$0xf]
    %v169 = vld [vmem:[%s3 + $0x8] sm:$0xf]
    %v170 = vld [vmem:[%s3 + $0xc] sm:$0xf]
    %v171 = vld [vmem:[%s3 + $0x10] sm:$0xf]
    %v172 = vld [vmem:[%s3 + $0x14] sm:$0xf]
    %v173 = vld [vmem:[%s3 + $0x18] sm:$0xf]
    %v174 = vld [vmem:[%s3 + $0x1c] sm:$0xf]
    %v175 = vld [vmem:[%s3 + $0x20] sm:$0xf]
    %v176 = vld [vmem:[%s3 + $0x24] sm:$0xf]
    %v177 = vld [vmem:[%s3 + $0x28] sm:$0xf]
    %v178 = vld [vmem:[%s3 + $0x2c] sm:$0xf]
    %v179 = vld [vmem:[%s3 + $0x30] sm:$0xf]
    %v180 = vld [vmem:[%s3 + $0x34] sm:$0xf]
    %v181 = vld [vmem:[%s3 + $0x38] sm:$0xf]
    %v182 = vld [vmem:[%s3 + $0x3c] sm:$0xf]
    %v183 = vld [vmem:[%s4] sm:$0x1]
    %v185 = vlaneseq
    %v186 = vshrl.u32 %v185, 7
    %v187 = vsub.s32 0, %v186
    %v188 = vrot.slane %v183, %v187
    %v206 = vunpack.c.l.b16 %v167
    %v207 = vunpack.c.l.b16 %v168
    %v208 = vunpack.c.l.b16 %v169
    %v209 = vunpack.c.l.b16 %v170
    %v210 = vunpack.c.l.b16 %v171
    %v211 = vunpack.c.l.b16 %v172
    %v212 = vunpack.c.l.b16 %v173
    %v213 = vunpack.c.l.b16 %v174
    %v214 = vunpack.c.l.b16 %v175
    %v215 = vunpack.c.l.b16 %v176
    %v216 = vunpack.c.l.b16 %v177
    %v217 = vunpack.c.l.b16 %v178
    %v218 = vunpack.c.l.b16 %v179
    %v219 = vunpack.c.l.b16 %v180
    %v220 = vunpack.c.l.b16 %v181
    %v221 = vunpack.c.l.b16 %v182
    %v222 = vpack.c.b16 %v207, %v206
    %v223 = vpack.c.b16 %v209, %v208
    %v224 = vpack.c.b16 %v211, %v210
    %v225 = vpack.c.b16 %v213, %v212
    %v226 = vpack.c.b16 %v215, %v214
    %v227 = vpack.c.b16 %v217, %v216
    %v228 = vpack.c.b16 %v219, %v218
    %v229 = vpack.c.b16 %v221, %v220
    %238 = vmatprep.subr.bf16.mxu0 0
    %239 = vmatpush1.bf16.msra.mxu0 %v229
    %240 = vmatprep.subr.bf16.mxu0 0
    %241 = vmatpush1.bf16.msra.mxu0 %v228
    %242 = vmatprep.subr.bf16.mxu0 0
    %243 = vmatpush1.bf16.msra.mxu0 %v227
    %244 = vmatprep.subr.bf16.mxu0 0
    %245 = vmatpush1.bf16.msra.mxu0 %v226
    %246 = vmatprep.subr.bf16.mxu0 0
    %247 = vmatpush1.bf16.msra.mxu0 %v225
    %248 = vmatprep.subr.bf16.mxu0 0
    %249 = vmatpush1.bf16.msra.mxu0 %v224
    %250 = vmatprep.subr.bf16.mxu0 0
    %251 = vmatpush1.bf16.msra.mxu0 %v223
    %252 = vmatprep.subr.bf16.mxu0 0
    %253 = vmatpush1.bf16.msra.mxu0 %v222
    %254 = vmatprep.subr.bf16.mxu0 0
    %255 = vmatpush2.bf16.msra.mxu0 0
    %256 = vmatprep.subr.bf16.mxu0 0
    %257 = vmatpush2.bf16.msra.mxu0 0
    %258 = vmatprep.subr.bf16.mxu0 0
    %259 = vmatpush2.bf16.msra.mxu0 0
    %260 = vmatprep.subr.bf16.mxu0 0
    %261 = vmatpush2.bf16.msra.mxu0 0
    %262 = vmatprep.subr.bf16.mxu0 0
    %263 = vmatpush2.bf16.msra.mxu0 0
    %264 = vmatprep.subr.bf16.mxu0 0
    %265 = vmatpush2.bf16.msra.mxu0 0
    %266 = vmatprep.subr.bf16.mxu0 0
    %267 = vmatpush2.bf16.msra.mxu0 0
    %268 = vmatprep.subr.bf16.mxu0 0
    %269 = vmatpush2.bf16.msra.mxu0 0
    %270 = vmatprep.mubr.bf16.mxu0 0
    %271 = vmatmul.mubr.bf16.gmra.mxu0 %v166
    %v272 = vpop.f32.mrf.mxu0
    %v273 = vadd.f32 %v188, %v272
    %v274 = vpop.f32.mrf.mxu0
    %v275 = vpop.f32.mrf.mxu0
    %v276 = vpop.f32.mrf.mxu0
    %277 = vdwg.mxu0
    %278 = vst [vmem:[#allocation2] sm:$0x3] %v273
    // Predicated region
    $region22: #{siamese_net.1} parent=1 // pred_check
      _
    $region23: #{siamese_net.1} parent=1 // pred_check_branch
      %280 = sbr.rel (0) target = $region25
    $region24: #{siamese_net.1} parent=1 // pred_region
      _
    $region25: #{siamese_net.1} parent=1 // pred_fallthru
      _
    // Predicated region
    $region26: #{siamese_net.1} parent=1 // pred_check
      _
    $region27: #{siamese_net.1} parent=1 // pred_check_branch
      %282 = sbr.rel (0) target = $region29
    $region28: #{siamese_net.1} parent=1 // pred_region
      %s284 = ssub.s32 32, 32
      %285 = vsyncadd [#allocation3], %s284
      %s287 = sshll.u32 [#allocation2], 4
      %s288 = int_to_ptr.vmem [resolvable:$true] %s287
      %290 = dma.vmem_to_hbm [thread:$0]  %s288, 32, %s6, [#allocation3]
    $region29: #{siamese_net.1} parent=1 // pred_fallthru
      _
    // Predicated region
    $region30: #{siamese_net.1} parent=1 // pred_check
      _
    $region31: #{siamese_net.1} parent=1 // pred_check_branch
      %292 = sbr.rel (0) target = $region33
    $region32: #{siamese_net.1} parent=1 // pred_region
      _
    $region33: #{siamese_net.1} parent=1 // pred_fallthru
      _
    // Predicated region
    $region34: #{siamese_net.1} parent=1 // pred_check
      _
    $region35: #{siamese_net.1} parent=1 // pred_check_branch
      %294 = sbr.rel (0) target = $region37
    $region36: #{siamese_net.1} parent=1 // pred_region
      %295 = dma.done [#allocation3], 32
    $region37: #{siamese_net.1} parent=1 // pred_fallthru
      _
    %296 = vsyncpa [#allocation3], 1

</llo_original>
